<compile_context>
chip_gen: v5e
topology: v5e:2x2
jax: 0.10.0
libtpu: 0.0.40
codegen_flags: <defaults>
</compile_context>

<pallas_src>
from functools import partial

import jax
import jax.numpy as jnp
from jax.experimental import pallas as pl
from jax.experimental.pallas import tpu as pltpu

SLAB = 128  # lane width of every packed activation / weight panel / vector row


# ----------------------------------------------------------------------------
# Single fused kernel: the whole `Layers.forward` in one pallas_call.
# ----------------------------------------------------------------------------
def _make_fused_kernel(n_mlp):
    def kernel(x_ref, w_ref, v_ref, out_ref):
        def matmul(x, i):  # (B,128) @ (128,128) on the MXU, fp32 accumulation
            return jnp.dot(x, w_ref[i], preferred_element_type=jnp.float32)

        def vec(i):  # one (1,128) bias/scale/shift row, broadcast over batch
            return v_ref[pl.ds(i, 1), :]

        def relu(x):
            return jnp.maximum(x, 0.0)

        def sigmoid(x):
            # Exact (non-approx) reciprocal per correctness feedback; negligible cost here.
            return 1.0 / (1.0 + jnp.exp(-x))

        wi = 0
        vi = 0
        x = x_ref[...]  # [image | text | 0-pad] packed along lanes

        # --- image/text MLPs, merged into block-diagonal panels ------------------------------
        # PyTorch MLP (eval): Linear -> Tanh -> BatchNorm1d(running stats) -> Dropout(identity)
        for _ in range(n_mlp):
            x = jnp.tanh(matmul(x, wi) + vec(vi)) * vec(vi + 1) + vec(vi + 2)
            wi += 1
            vi += 3
        h = x  # [imageH | textH | 0]

        # --- ifeat/tfeat gates, merged (Linear -> ReLU -> Linear -> Sigmoid) * features ------
        g = relu(matmul(h, wi) + vec(vi)); wi += 1; vi += 1
        gate = sigmoid(matmul(g, wi) + vec(vi)); wi += 1; vi += 1
        gated = gate * h  # [image_feat | text_feat | 0]   (padded lanes: 0.5 * 0 = 0)

        # --- Fusion: Tanh(BatchNorm(Linear(image_feat + text_feat))); BN folded into the
        #     linear, branch sum folded into a row-stacked weight panel ------------------------
        fused = jnp.tanh(matmul(gated, wi) + vec(vi)); wi += 1; vi += 1

        # --- fusion_layer: Linear + ReLU (the following self.activation ReLU is a no-op) ------
        cfeat = relu(matmul(fused, wi) + vec(vi)); wi += 1; vi += 1

        # --- neck: Linear + ReLU + Dropout(identity) + Linear; nec_vec -> lanes [0, common) ---
        n1 = relu(matmul(cfeat, wi) + vec(vi)); wi += 1; vi += 1
        nec = matmul(n1, wi) + vec(vi); wi += 1; vi += 1

        # --- hash_output: Linear + Tanh; code -> lanes [common, common+nbit) -------------------
        code = jnp.tanh(matmul(nec, wi) + vec(vi)); wi += 1; vi += 1

        # --- classify: Linear; logits -> lanes [common+nbit, common+nbit+classes) --------------
        logits = matmul(code, wi) + vec(vi)

        # Heads already live in disjoint lane ranges (zero elsewhere): one full lane-dense store.
        out_ref[...] = (nec + code + logits).astype(out_ref.dtype)

    return kernel


# ----------------------------------------------------------------------------
# Parameter init (deterministic, synthetic) — mirrors the PyTorch module.
# ----------------------------------------------------------------------------
def init_linear(key, din, dout):
    k1, k2 = jax.random.split(key)
    bound = 1.0 / float(din) ** 0.5
    w = jax.random.uniform(k1, (din, dout), jnp.float32, -bound, bound)
    b = jax.random.uniform(k2, (dout,), jnp.float32, -bound, bound)
    return w, b


def init_bn(key, d):
    k1, k2, k3 = jax.random.split(key, 3)
    gamma = 1.0 + 0.1 * jax.random.normal(k1, (d,), jnp.float32)
    beta = 0.1 * jax.random.normal(k2, (d,), jnp.float32)
    mean = 0.1 * jax.random.normal(k3, (d,), jnp.float32)
    var = jnp.ones((d,), jnp.float32)
    return gamma, beta, mean, var


def init_layers_params(key, img_hidden, txt_hidden, nbit, classes):
    assert img_hidden[-1] == txt_hidden[-1]
    common = img_hidden[-1]
    keys = iter(jax.random.split(key, 64))

    def mlp_params(hidden):
        dims = [hidden[0]] + list(hidden)  # executed layer i: dims[i] -> dims[i+1]
        layers = []
        for i in range(len(hidden)):
            w, b = init_linear(next(keys), dims[i], dims[i + 1])
            bn = init_bn(next(keys), dims[i + 1])
            layers.append((w, b, bn))
        return layers

    return {
        "imageMLP": mlp_params(img_hidden),
        "textMLP": mlp_params(txt_hidden),
        "ifeat_gate": (
            init_linear(next(keys), common, common * 2),
            init_linear(next(keys), common * 2, common),
        ),
        "tfeat_gate": (
            init_linear(next(keys), common, common * 2),
            init_linear(next(keys), common * 2, common),
        ),
        "fusion_hash": (init_linear(next(keys), common, nbit), init_bn(next(keys), nbit)),
        "fusion_layer": init_linear(next(keys), nbit, common),
        "neck": (
            init_linear(next(keys), common, common * 4),
            init_linear(next(keys), common * 4, common),
        ),
        "hash_output": init_linear(next(keys), common, nbit),
        "classify": init_linear(next(keys), nbit, classes),
    }


# ----------------------------------------------------------------------------
# One-time packing: BN folding, block-diagonal branch merging, slab packing.
# ----------------------------------------------------------------------------
def pack_params(params, eps=1e-5):
    img, txt = params["imageMLP"], params["textMLP"]
    assert len(img) == len(txt), "merged kernel assumes equal image/text MLP depth"
    n_mlp = len(img)
    common = img[-1][0].shape[1]
    nbit = params["hash_output"][0].shape[1]
    classes = params["classify"][0].shape[1]

    def bn_post(bn):  # post-activation BatchNorm1d (running stats) as scale/shift
        g, be, m, v = bn
        sc = g * jax.lax.rsqrt(v + eps)
        return sc, be - m * sc

    def panel(blocks):  # zero-padded 128x128 panel with sub-blocks placed at (row, col) offsets
        p = jnp.zeros((SLAB, SLAB), jnp.float32)
        for w, r, c in blocks:
            assert r + w.shape[0] <= SLAB and c + w.shape[1] <= SLAB
            p = p.at[r : r + w.shape[0], c : c + w.shape[1]].set(w.astype(jnp.float32))
        return p

    def row(parts):  # zero-padded (128,) vector row with segments placed at lane offsets
        v = jnp.zeros((SLAB,), jnp.float32)
        for x, off in parts:
            assert off + x.shape[0] <= SLAB
            v = v.at[off : off + x.shape[0]].set(x.astype(jnp.float32))
        return v

    panels, rows = [], []

    # Merged MLP stages: block-diag weight, concatenated bias / BN scale / BN shift rows.
    for (wi_, bi_, bni), (wt_, bt_, bnt) in zip(img, txt):
        ki, ni = wi_.shape
        sci, shi = bn_post(bni)
        sct, sht = bn_post(bnt)
        panels.append(panel([(wi_, 0, 0), (wt_, ki, ni)]))
        rows.append(row([(bi_, 0), (bt_, ni)]))
        rows.append(row([(sci, 0), (sct, ni)]))
        rows.append(row([(shi, 0), (sht, ni)]))

    # Merged gates (Linear -> ReLU -> Linear -> Sigmoid): image block, then text block.
    (wi1, bi1), (wi2, bi2) = params["ifeat_gate"]
    (wt1, bt1), (wt2, bt2) = params["tfeat_gate"]
    c2 = 2 * common
    panels.append(panel([(wi1, 0, 0), (wt1, common, c2)]))
    rows.append(row([(bi1, 0), (bt1, c2)]))
    panels.append(panel([(wi2, 0, 0), (wt2, c2, common)]))
    rows.append(row([(bi2, 0), (bt2, common)]))

    # Fusion: Linear -> BN -> Tanh; BN folds into the linear, and the (image_feat + text_feat)
    # branch sum folds into a row-stacked panel acting on the packed [image_feat | text_feat].
    (wf, bf), (g, be, m, v) = params["fusion_hash"]
    sc = g * jax.lax.rsqrt(v + eps)
    wff = wf * sc[None, :]
    bff = (bf - m) * sc + be
    panels.append(panel([(wff, 0, 0), (wff, common, 0)]))
    rows.append(row([(bff, 0)]))

    # fusion_layer: Linear (+ReLU in kernel).
    wl, bl = params["fusion_layer"]
    panels.append(panel([(wl, 0, 0)]))
    rows.append(row([(bl, 0)]))

    # neck: Linear + ReLU + Linear; nec_vec lands in lanes [0, common).
    (wn1, bn1), (wn2, bn2) = params["neck"]
    panels.append(panel([(wn1, 0, 0)]))
    rows.append(row([(bn1, 0)]))
    panels.append(panel([(wn2, 0, 0)]))
    rows.append(row([(bn2, 0)]))

    # hash_output: reads lanes [0, common), writes code to lanes [common, common+nbit).
    wh, bh = params["hash_output"]
    panels.append(panel([(wh, 0, common)]))
    rows.append(row([(bh, common)]))

    # classify: reads lanes [common, common+nbit), writes logits right after.
    wc, bc = params["classify"]
    panels.append(panel([(wc, common, common + nbit)]))
    rows.append(row([(bc, common + nbit)]))

    wslab = jnp.stack(panels)  # (n_mats, 128, 128) -> ONE weight DMA
    vslab = jnp.stack(rows)    # (n_vecs, 128)      -> ONE vector DMA
    pad = (-vslab.shape[0]) % 8
    if pad:
        vslab = jnp.concatenate([vslab, jnp.zeros((pad, SLAB), jnp.float32)], axis=0)

    meta = (n_mlp, common, nbit, classes)
    return wslab, vslab, meta


# ----------------------------------------------------------------------------
# Full forward pass of `Layers`: a single jitted function around one pallas_call.
# ----------------------------------------------------------------------------
@partial(jax.jit, static_argnums=(0,))
def _fused_forward(meta, image, text, wslab, vslab):
    n_mlp, common, nbit, classes = meta
    bsz, di = image.shape
    dt = text.shape[1]
    assert di + dt <= SLAB and common + nbit + classes <= SLAB

    # Single lane-packed input slab [image | text | 0-pad] -> one input DMA.
    x0 = jnp.zeros((bsz, SLAB), jnp.float32)
    x0 = x0.at[:, :di].set(image.astype(jnp.float32))
    x0 = x0.at[:, di : di + dt].set(text.astype(jnp.float32))

    out = pl.pallas_call(
        _make_fused_kernel(n_mlp),
        out_shape=jax.ShapeDtypeStruct((bsz, SLAB), jnp.float32),
        # Whole-array VMEM residency; single invocation (no grid) at this tiny size.
        in_specs=[pl.BlockSpec(memory_space=pltpu.MemorySpace.VMEM)] * 3,
        out_specs=pl.BlockSpec(memory_space=pltpu.MemorySpace.VMEM),
    )(x0, wslab, vslab)

    nec_vec = out[:, :common]
    code = out[:, common : common + nbit]
    logits = out[:, common + nbit : common + nbit + classes]
    return nec_vec, code, logits


def layers_forward(packed, image, text):
    wslab, vslab, meta = packed
    return _fused_forward(meta, image, text, wslab, vslab)


# ----------------------------------------------------------------------------
# Pure-JAX reference of the PyTorch eval forward (for a correctness check).
# ----------------------------------------------------------------------------
def _reference_forward(params, image, text, eps=1e-5):
    def bn_post(bn):
        g, be, m, v = bn
        sc = g * jax.lax.rsqrt(v + eps)
        return sc, be - m * sc

    def mlp(layers, x):
        for w, b, bn in layers:
            sc, sh = bn_post(bn)
            x = jnp.tanh(x @ w + b) * sc + sh
        return x

    imageH = mlp(params["imageMLP"], image)
    textH = mlp(params["textMLP"], text)

    def gate(p, h):
        (w1, b1), (w2, b2) = p
        g = jnp.maximum(h @ w1 + b1, 0.0)
        return jax.nn.sigmoid(g @ w2 + b2) * h

    image_feat = gate(params["ifeat_gate"], imageH)
    text_feat = gate(params["tfeat_gate"], textH)

    (wf, bf), (g, be, m, v) = params["fusion_hash"]
    sc = g * jax.lax.rsqrt(v + eps)
    z = (image_feat + text_feat) @ wf + bf
    fused = jnp.tanh((z - m) * sc + be)

    wl, bl = params["fusion_layer"]
    cfeat = jnp.maximum(fused @ wl + bl, 0.0)
    (wn1, bn1), (wn2, bn2) = params["neck"]
    nec = jnp.maximum(cfeat @ wn1 + bn1, 0.0) @ wn2 + bn2
    wh, bh = params["hash_output"]
    code = jnp.tanh(nec @ wh + bh)
    wc, bc = params["classify"]
    return nec, code, code @ wc + bc


if __name__ == "__main__":
    # Small, consistent shapes (batch = 8 matches the fp32 sublane count).
    batch = 8
    img_hidden_dim = [32, 64, 16]
    txt_hidden_dim = [24, 64, 16]
    nbit = 16
    classes = 8

    key = jax.random.PRNGKey(0)
    kp, ki, kt = jax.random.split(key, 3)
    params = init_layers_params(kp, img_hidden_dim, txt_hidden_dim, nbit, classes)
    packed = pack_params(params)  # BN folding + branch merging + slab packing: done ONCE

    image = jax.random.normal(ki, (batch, img_hidden_dim[0]), jnp.float32)
    text = jax.random.normal(kt, (batch, txt_hidden_dim[0]), jnp.float32)

    nec_vec, code, logits = layers_forward(packed, image, text)
    jax.block_until_ready((nec_vec, code, logits))

    assert nec_vec.shape == (batch, img_hidden_dim[-1])
    assert code.shape == (batch, nbit)
    assert logits.shape == (batch, classes)

    # Correctness check against the pure-JAX reference of the PyTorch eval forward.
    ref_nec, ref_code, ref_logits = _reference_forward(params, image, text)
    assert bool(jnp.all(jnp.isfinite(nec_vec))) and bool(jnp.all(jnp.isfinite(code)))
    assert bool(jnp.all(jnp.isfinite(logits)))
    assert bool(jnp.allclose(nec_vec, ref_nec, rtol=5e-2, atol=5e-2))
    assert bool(jnp.allclose(code, ref_code, rtol=5e-2, atol=5e-2))
    assert bool(jnp.allclose(logits, ref_logits, rtol=5e-2, atol=5e-2))

    print("KERNEL_OK")
</pallas_src>

<mosaic_0001>
module attributes {stable_mosaic.version = 11 : i64} {
  func.func @kernel(%arg0: memref<8x128xf32, #tpu.memory_space<vmem>>, %arg1: memref<11x128x128xf32, #tpu.memory_space<vmem>>, %arg2: memref<24x128xf32, #tpu.memory_space<vmem>>, %arg3: memref<8x128xf32, #tpu.memory_space<vmem>>) attributes {dimension_semantics = [], scalar_prefetch = 0 : i64, scratch_operands = 0 : i64, tpu.core_type = #tpu.core_type<tc>} {
    %c0 = arith.constant 0 : index
    %c0_0 = arith.constant 0 : index
    %0 = vector.load %arg0[%c0, %c0_0] : memref<8x128xf32, #tpu.memory_space<vmem>>, vector<8x128xf32>
    %c0_1 = arith.constant 0 : index
    %c0_2 = arith.constant 0 : index
    %c0_3 = arith.constant 0 : index
    %1 = vector.load %arg1[%c0_1, %c0_2, %c0_3] : memref<11x128x128xf32, #tpu.memory_space<vmem>>, vector<1x128x128xf32>
    %2 = vector.shape_cast %1 : vector<1x128x128xf32> to vector<128x128xf32>
    %cst = arith.constant dense<0.000000e+00> : vector<8x128xf32>
    %3 = tpu.matmul %0, %2, %cst {dimension_numbers = #tpu.dot_dimension_numbers<[1], [0], [0], [1], [0, 0, 1, 1], [], []>} : vector<8x128xf32>, vector<128x128xf32>, vector<8x128xf32> -> vector<8x128xf32>
    %c0_4 = arith.constant 0 : index
    %c0_5 = arith.constant 0 : index
    %4 = vector.load %arg2[%c0_4, %c0_5] : memref<24x128xf32, #tpu.memory_space<vmem>>, vector<1x128xf32>
    %5 = vector.broadcast %4 : vector<1x128xf32> to vector<8x128xf32>
    %6 = arith.addf %3, %5 : vector<8x128xf32>
    %7 = math.tanh %6 : vector<8x128xf32>
    %c1 = arith.constant 1 : index
    %c0_6 = arith.constant 0 : index
    %8 = vector.load %arg2[%c1, %c0_6] : memref<24x128xf32, #tpu.memory_space<vmem>>, vector<1x128xf32>
    %9 = vector.broadcast %8 : vector<1x128xf32> to vector<8x128xf32>
    %10 = arith.mulf %7, %9 : vector<8x128xf32>
    %c2 = arith.constant 2 : index
    %c0_7 = arith.constant 0 : index
    %11 = vector.load %arg2[%c2, %c0_7] : memref<24x128xf32, #tpu.memory_space<vmem>>, vector<1x128xf32>
    %12 = vector.broadcast %11 : vector<1x128xf32> to vector<8x128xf32>
    %13 = arith.addf %10, %12 : vector<8x128xf32>
    %c1_8 = arith.constant 1 : index
    %c0_9 = arith.constant 0 : index
    %c0_10 = arith.constant 0 : index
    %14 = vector.load %arg1[%c1_8, %c0_9, %c0_10] : memref<11x128x128xf32, #tpu.memory_space<vmem>>, vector<1x128x128xf32>
    %15 = vector.shape_cast %14 : vector<1x128x128xf32> to vector<128x128xf32>
    %cst_11 = arith.constant dense<0.000000e+00> : vector<8x128xf32>
    %16 = tpu.matmul %13, %15, %cst_11 {dimension_numbers = #tpu.dot_dimension_numbers<[1], [0], [0], [1], [0, 0, 1, 1], [], []>} : vector<8x128xf32>, vector<128x128xf32>, vector<8x128xf32> -> vector<8x128xf32>
    %c3 = arith.constant 3 : index
    %c0_12 = arith.constant 0 : index
    %17 = vector.load %arg2[%c3, %c0_12] : memref<24x128xf32, #tpu.memory_space<vmem>>, vector<1x128xf32>
    %18 = vector.broadcast %17 : vector<1x128xf32> to vector<8x128xf32>
    %19 = arith.addf %16, %18 : vector<8x128xf32>
    %20 = math.tanh %19 : vector<8x128xf32>
    %c4 = arith.constant 4 : index
    %c0_13 = arith.constant 0 : index
    %21 = vector.load %arg2[%c4, %c0_13] : memref<24x128xf32, #tpu.memory_space<vmem>>, vector<1x128xf32>
    %22 = vector.broadcast %21 : vector<1x128xf32> to vector<8x128xf32>
    %23 = arith.mulf %20, %22 : vector<8x128xf32>
    %c5 = arith.constant 5 : index
    %c0_14 = arith.constant 0 : index
    %24 = vector.load %arg2[%c5, %c0_14] : memref<24x128xf32, #tpu.memory_space<vmem>>, vector<1x128xf32>
    %25 = vector.broadcast %24 : vector<1x128xf32> to vector<8x128xf32>
    %26 = arith.addf %23, %25 : vector<8x128xf32>
    %c2_15 = arith.constant 2 : index
    %c0_16 = arith.constant 0 : index
    %c0_17 = arith.constant 0 : index
    %27 = vector.load %arg1[%c2_15, %c0_16, %c0_17] : memref<11x128x128xf32, #tpu.memory_space<vmem>>, vector<1x128x128xf32>
    %28 = vector.shape_cast %27 : vector<1x128x128xf32> to vector<128x128xf32>
    %cst_18 = arith.constant dense<0.000000e+00> : vector<8x128xf32>
    %29 = tpu.matmul %26, %28, %cst_18 {dimension_numbers = #tpu.dot_dimension_numbers<[1], [0], [0], [1], [0, 0, 1, 1], [], []>} : vector<8x128xf32>, vector<128x128xf32>, vector<8x128xf32> -> vector<8x128xf32>
    %c6 = arith.constant 6 : index
    %c0_19 = arith.constant 0 : index
    %30 = vector.load %arg2[%c6, %c0_19] : memref<24x128xf32, #tpu.memory_space<vmem>>, vector<1x128xf32>
    %31 = vector.broadcast %30 : vector<1x128xf32> to vector<8x128xf32>
    %32 = arith.addf %29, %31 : vector<8x128xf32>
    %33 = math.tanh %32 : vector<8x128xf32>
    %c7 = arith.constant 7 : index
    %c0_20 = arith.constant 0 : index
    %34 = vector.load %arg2[%c7, %c0_20] : memref<24x128xf32, #tpu.memory_space<vmem>>, vector<1x128xf32>
    %35 = vector.broadcast %34 : vector<1x128xf32> to vector<8x128xf32>
    %36 = arith.mulf %33, %35 : vector<8x128xf32>
    %c8 = arith.constant 8 : index
    %c0_21 = arith.constant 0 : index
    %37 = vector.load %arg2[%c8, %c0_21] : memref<24x128xf32, #tpu.memory_space<vmem>>, vector<1x128xf32>
    %38 = vector.broadcast %37 : vector<1x128xf32> to vector<8x128xf32>
    %39 = arith.addf %36, %38 : vector<8x128xf32>
    %c3_22 = arith.constant 3 : index
    %c0_23 = arith.constant 0 : index
    %c0_24 = arith.constant 0 : index
    %40 = vector.load %arg1[%c3_22, %c0_23, %c0_24] : memref<11x128x128xf32, #tpu.memory_space<vmem>>, vector<1x128x128xf32>
    %41 = vector.shape_cast %40 : vector<1x128x128xf32> to vector<128x128xf32>
    %cst_25 = arith.constant dense<0.000000e+00> : vector<8x128xf32>
    %42 = tpu.matmul %39, %41, %cst_25 {dimension_numbers = #tpu.dot_dimension_numbers<[1], [0], [0], [1], [0, 0, 1, 1], [], []>} : vector<8x128xf32>, vector<128x128xf32>, vector<8x128xf32> -> vector<8x128xf32>
    %c9 = arith.constant 9 : index
    %c0_26 = arith.constant 0 : index
    %43 = vector.load %arg2[%c9, %c0_26] : memref<24x128xf32, #tpu.memory_space<vmem>>, vector<1x128xf32>
    %44 = vector.broadcast %43 : vector<1x128xf32> to vector<8x128xf32>
    %45 = arith.addf %42, %44 : vector<8x128xf32>
    %cst_27 = arith.constant 0.000000e+00 : f32
    %46 = vector.broadcast %cst_27 : f32 to vector<8x128xf32>
    %47 = arith.maximumf %45, %46 : vector<8x128xf32>
    %c4_28 = arith.constant 4 : index
    %c0_29 = arith.constant 0 : index
    %c0_30 = arith.constant 0 : index
    %48 = vector.load %arg1[%c4_28, %c0_29, %c0_30] : memref<11x128x128xf32, #tpu.memory_space<vmem>>, vector<1x128x128xf32>
    %49 = vector.shape_cast %48 : vector<1x128x128xf32> to vector<128x128xf32>
    %cst_31 = arith.constant dense<0.000000e+00> : vector<8x128xf32>
    %50 = tpu.matmul %47, %49, %cst_31 {dimension_numbers = #tpu.dot_dimension_numbers<[1], [0], [0], [1], [0, 0, 1, 1], [], []>} : vector<8x128xf32>, vector<128x128xf32>, vector<8x128xf32> -> vector<8x128xf32>
    %c10 = arith.constant 10 : index
    %c0_32 = arith.constant 0 : index
    %51 = vector.load %arg2[%c10, %c0_32] : memref<24x128xf32, #tpu.memory_space<vmem>>, vector<1x128xf32>
    %52 = vector.broadcast %51 : vector<1x128xf32> to vector<8x128xf32>
    %53 = arith.addf %50, %52 : vector<8x128xf32>
    %cst_33 = arith.constant 0.000000e+00 : f32
    %54 = vector.broadcast %cst_33 : f32 to vector<8x128xf32>
    %55 = arith.subf %54, %53 : vector<8x128xf32>
    %56 = math.exp %55 : vector<8x128xf32>
    %cst_34 = arith.constant 1.000000e+00 : f32
    %57 = vector.broadcast %cst_34 : f32 to vector<8x128xf32>
    %58 = arith.addf %57, %56 : vector<8x128xf32>
    %cst_35 = arith.constant 1.000000e+00 : f32
    %59 = vector.broadcast %cst_35 : f32 to vector<8x128xf32>
    %60 = arith.divf %59, %58 : vector<8x128xf32>
    %61 = arith.mulf %60, %39 : vector<8x128xf32>
    %c5_36 = arith.constant 5 : index
    %c0_37 = arith.constant 0 : index
    %c0_38 = arith.constant 0 : index
    %62 = vector.load %arg1[%c5_36, %c0_37, %c0_38] : memref<11x128x128xf32, #tpu.memory_space<vmem>>, vector<1x128x128xf32>
    %63 = vector.shape_cast %62 : vector<1x128x128xf32> to vector<128x128xf32>
    %cst_39 = arith.constant dense<0.000000e+00> : vector<8x128xf32>
    %64 = tpu.matmul %61, %63, %cst_39 {dimension_numbers = #tpu.dot_dimension_numbers<[1], [0], [0], [1], [0, 0, 1, 1], [], []>} : vector<8x128xf32>, vector<128x128xf32>, vector<8x128xf32> -> vector<8x128xf32>
    %c11 = arith.constant 11 : index
    %c0_40 = arith.constant 0 : index
    %65 = vector.load %arg2[%c11, %c0_40] : memref<24x128xf32, #tpu.memory_space<vmem>>, vector<1x128xf32>
    %66 = vector.broadcast %65 : vector<1x128xf32> to vector<8x128xf32>
    %67 = arith.addf %64, %66 : vector<8x128xf32>
    %68 = math.tanh %67 : vector<8x128xf32>
    %c6_41 = arith.constant 6 : index
    %c0_42 = arith.constant 0 : index
    %c0_43 = arith.constant 0 : index
    %69 = vector.load %arg1[%c6_41, %c0_42, %c0_43] : memref<11x128x128xf32, #tpu.memory_space<vmem>>, vector<1x128x128xf32>
    %70 = vector.shape_cast %69 : vector<1x128x128xf32> to vector<128x128xf32>
    %cst_44 = arith.constant dense<0.000000e+00> : vector<8x128xf32>
    %71 = tpu.matmul %68, %70, %cst_44 {dimension_numbers = #tpu.dot_dimension_numbers<[1], [0], [0], [1], [0, 0, 1, 1], [], []>} : vector<8x128xf32>, vector<128x128xf32>, vector<8x128xf32> -> vector<8x128xf32>
    %c12 = arith.constant 12 : index
    %c0_45 = arith.constant 0 : index
    %72 = vector.load %arg2[%c12, %c0_45] : memref<24x128xf32, #tpu.memory_space<vmem>>, vector<1x128xf32>
    %73 = vector.broadcast %72 : vector<1x128xf32> to vector<8x128xf32>
    %74 = arith.addf %71, %73 : vector<8x128xf32>
    %cst_46 = arith.constant 0.000000e+00 : f32
    %75 = vector.broadcast %cst_46 : f32 to vector<8x128xf32>
    %76 = arith.maximumf %74, %75 : vector<8x128xf32>
    %c7_47 = arith.constant 7 : index
    %c0_48 = arith.constant 0 : index
    %c0_49 = arith.constant 0 : index
    %77 = vector.load %arg1[%c7_47, %c0_48, %c0_49] : memref<11x128x128xf32, #tpu.memory_space<vmem>>, vector<1x128x128xf32>
    %78 = vector.shape_cast %77 : vector<1x128x128xf32> to vector<128x128xf32>
    %cst_50 = arith.constant dense<0.000000e+00> : vector<8x128xf32>
    %79 = tpu.matmul %76, %78, %cst_50 {dimension_numbers = #tpu.dot_dimension_numbers<[1], [0], [0], [1], [0, 0, 1, 1], [], []>} : vector<8x128xf32>, vector<128x128xf32>, vector<8x128xf32> -> vector<8x128xf32>
    %c13 = arith.constant 13 : index
    %c0_51 = arith.constant 0 : index
    %80 = vector.load %arg2[%c13, %c0_51] : memref<24x128xf32, #tpu.memory_space<vmem>>, vector<1x128xf32>
    %81 = vector.broadcast %80 : vector<1x128xf32> to vector<8x128xf32>
    %82 = arith.addf %79, %81 : vector<8x128xf32>
    %cst_52 = arith.constant 0.000000e+00 : f32
    %83 = vector.broadcast %cst_52 : f32 to vector<8x128xf32>
    %84 = arith.maximumf %82, %83 : vector<8x128xf32>
    %c8_53 = arith.constant 8 : index
    %c0_54 = arith.constant 0 : index
    %c0_55 = arith.constant 0 : index
    %85 = vector.load %arg1[%c8_53, %c0_54, %c0_55] : memref<11x128x128xf32, #tpu.memory_space<vmem>>, vector<1x128x128xf32>
    %86 = vector.shape_cast %85 : vector<1x128x128xf32> to vector<128x128xf32>
    %cst_56 = arith.constant dense<0.000000e+00> : vector<8x128xf32>
    %87 = tpu.matmul %84, %86, %cst_56 {dimension_numbers = #tpu.dot_dimension_numbers<[1], [0], [0], [1], [0, 0, 1, 1], [], []>} : vector<8x128xf32>, vector<128x128xf32>, vector<8x128xf32> -> vector<8x128xf32>
    %c14 = arith.constant 14 : index
    %c0_57 = arith.constant 0 : index
    %88 = vector.load %arg2[%c14, %c0_57] : memref<24x128xf32, #tpu.memory_space<vmem>>, vector<1x128xf32>
    %89 = vector.broadcast %88 : vector<1x128xf32> to vector<8x128xf32>
    %90 = arith.addf %87, %89 : vector<8x128xf32>
    %c9_58 = arith.constant 9 : index
    %c0_59 = arith.constant 0 : index
    %c0_60 = arith.constant 0 : index
    %91 = vector.load %arg1[%c9_58, %c0_59, %c0_60] : memref<11x128x128xf32, #tpu.memory_space<vmem>>, vector<1x128x128xf32>
    %92 = vector.shape_cast %91 : vector<1x128x128xf32> to vector<128x128xf32>
    %cst_61 = arith.constant dense<0.000000e+00> : vector<8x128xf32>
    %93 = tpu.matmul %90, %92, %cst_61 {dimension_numbers = #tpu.dot_dimension_numbers<[1], [0], [0], [1], [0, 0, 1, 1], [], []>} : vector<8x128xf32>, vector<128x128xf32>, vector<8x128xf32> -> vector<8x128xf32>
    %c15 = arith.constant 15 : index
    %c0_62 = arith.constant 0 : index
    %94 = vector.load %arg2[%c15, %c0_62] : memref<24x128xf32, #tpu.memory_space<vmem>>, vector<1x128xf32>
    %95 = vector.broadcast %94 : vector<1x128xf32> to vector<8x128xf32>
    %96 = arith.addf %93, %95 : vector<8x128xf32>
    %97 = math.tanh %96 : vector<8x128xf32>
    %c10_63 = arith.constant 10 : index
    %c0_64 = arith.constant 0 : index
    %c0_65 = arith.constant 0 : index
    %98 = vector.load %arg1[%c10_63, %c0_64, %c0_65] : memref<11x128x128xf32, #tpu.memory_space<vmem>>, vector<1x128x128xf32>
    %99 = vector.shape_cast %98 : vector<1x128x128xf32> to vector<128x128xf32>
    %cst_66 = arith.constant dense<0.000000e+00> : vector<8x128xf32>
    %100 = tpu.matmul %97, %99, %cst_66 {dimension_numbers = #tpu.dot_dimension_numbers<[1], [0], [0], [1], [0, 0, 1, 1], [], []>} : vector<8x128xf32>, vector<128x128xf32>, vector<8x128xf32> -> vector<8x128xf32>
    %c16 = arith.constant 16 : index
    %c0_67 = arith.constant 0 : index
    %101 = vector.load %arg2[%c16, %c0_67] : memref<24x128xf32, #tpu.memory_space<vmem>>, vector<1x128xf32>
    %102 = vector.broadcast %101 : vector<1x128xf32> to vector<8x128xf32>
    %103 = arith.addf %100, %102 : vector<8x128xf32>
    %104 = arith.addf %90, %97 : vector<8x128xf32>
    %105 = arith.addf %104, %103 : vector<8x128xf32>
    %c0_68 = arith.constant 0 : index
    %c0_69 = arith.constant 0 : index
    %106 = vector.load %arg3[%c0_68, %c0_69] : memref<8x128xf32, #tpu.memory_space<vmem>>, vector<8x128xf32>
    tpu.vector_store %arg3[%c0_68, %c0_69], %105 {strides = array<i32>} : memref<8x128xf32, #tpu.memory_space<vmem>>, vector<8x128xf32>,
    return
  }
}

</mosaic_0001>

<llo_original>
// kernel: _fused_forward.1
$region0: #{_fused_forward.1}
  #allocation0 [shape = 'u32[]', space=smem, size = 0x4, offset = 0x4, fixed_abs, tag = 'smem constant byte address 0x4 - core index']
  #allocation1 [shape = 'u32[72,128]{1,0:T(1,128)}', space=vmem, size = 0x9000, scoped, tag = 'internal scratch']
  %s0 = inlined_call_operand.vmem [shape: f32[8,128], index: 0, kind: input, shape index: {}]
  %s1 = inlined_call_operand.hbm [shape: f32[11,128,128], index: 1, kind: input, shape index: {}]
  %s2 = inlined_call_operand.vmem [shape: f32[24,128], index: 2, kind: input, shape index: {}]
  %s3 = inlined_call_operand.vmem [shape: f32[8,128], index: 3, kind: output, shape index: {}]
  %s4 = sld [smem:[#allocation0]]
  $region26: #{_fused_forward.1} parent=0
    _
  %s6 = ssub.s32 1, %s4
  %s7 = scalar_select 0, %s6, %s4
  $region1: #{_fused_forward.1} parent=0
    #allocation2 [shape = 'u8[720896]{0}', space=vmem, size = 0xb0000, scoped, tag = 'input window, operand 1, single buffered']
    #allocation3 [shape = 's32[1]{0}', space=sflag, size = 0x4, scoped, tag = 'scoped memory for _fused_forward.1']
    %8 = vsyncpa [#allocation3], 0
    // Predicated region
    $region2: #{_fused_forward.1} parent=1 // pred_check
      _
    $region3: #{_fused_forward.1} parent=1 // pred_check_branch
      %10 = sbr.rel (0) target = $region5
    $region4: #{_fused_forward.1} parent=1 // pred_region
      _
    $region5: #{_fused_forward.1} parent=1 // pred_fallthru
      _
    // Predicated region
    $region6: #{_fused_forward.1} parent=1 // pred_check
      _
    $region7: #{_fused_forward.1} parent=1 // pred_check_branch
      %12 = sbr.rel (0) target = $region9
    $region8: #{_fused_forward.1} parent=1 // pred_region
      %14 = vsyncadd [#allocation3], 0
      %s15 = sshll.u32 %s1, 4
      %s16 = int_to_ptr.hbm [resolvable:$true] %s15
      %s17 = sshll.u32 [#allocation2], 4
      %s18 = int_to_ptr.vmem [resolvable:$true] %s17
      %23 = dma.hbm_to_vmem [thread:$0]  %s16, 22528, %s18, [#allocation3], 128, 128, 8
    $region9: #{_fused_forward.1} parent=1 // pred_fallthru
      _
    // Predicated region
    $region10: #{_fused_forward.1} parent=1 // pred_check
      _
    $region11: #{_fused_forward.1} parent=1 // pred_check_branch
      %25 = sbr.rel (0) target = $region13
    $region12: #{_fused_forward.1} parent=1 // pred_region
      _
    $region13: #{_fused_forward.1} parent=1 // pred_fallthru
      _
    // Predicated region
    $region14: #{_fused_forward.1} parent=1 // pred_check
      _
    $region15: #{_fused_forward.1} parent=1 // pred_check_branch
      %27 = sbr.rel (0) target = $region17
    $region16: #{_fused_forward.1} parent=1 // pred_region
      %29 = dma.done [#allocation3], 22528
    $region17: #{_fused_forward.1} parent=1 // pred_fallthru
      _
    %v30 = vld [vmem:[%s0] sm:$0xff]
    %v31 = vld [vmem:[#allocation2] sm:$0xff]
    %v32 = vld [vmem:[#allocation2 + $0x8] sm:$0xff]
    %v33 = vld [vmem:[#allocation2 + $0x10] sm:$0xff]
    %v34 = vld [vmem:[#allocation2 + $0x18] sm:$0xff]
    %v35 = vld [vmem:[#allocation2 + $0x20] sm:$0xff]
    %v36 = vld [vmem:[#allocation2 + $0x28] sm:$0xff]
    %v37 = vld [vmem:[#allocation2 + $0x30] sm:$0xff]
    %v38 = vld [vmem:[#allocation2 + $0x38] sm:$0xff]
    %v39 = vld [vmem:[#allocation2 + $0x40] sm:$0xff]
    %v40 = vld [vmem:[#allocation2 + $0x48] sm:$0xff]
    %v41 = vld [vmem:[#allocation2 + $0x50] sm:$0xff]
    %v42 = vld [vmem:[#allocation2 + $0x58] sm:$0xff]
    %v43 = vld [vmem:[#allocation2 + $0x60] sm:$0xff]
    %v44 = vld [vmem:[#allocation2 + $0x68] sm:$0xff]
    %v45 = vld [vmem:[#allocation2 + $0x70] sm:$0xff]
    %v46 = vld [vmem:[#allocation2 + $0x78] sm:$0xff]
    %v47 = vld [vmem:[%s2] sm:$0x1]
    %v48 = vperm.slane %v47, 0
    %49 = vmatpush.msra.mxu0 %v46
    %50 = vmatpush.msra.mxu0 %v45
    %51 = vmatpush.msra.mxu0 %v44
    %52 = vmatpush.msra.mxu0 %v43
    %53 = vmatpush.msra.mxu0 %v42
    %54 = vmatpush.msra.mxu0 %v41
    %55 = vmatpush.msra.mxu0 %v40
    %56 = vmatpush.msra.mxu0 %v39
    %57 = vmatpush.msra.mxu0 %v38
    %58 = vmatpush.msra.mxu0 %v37
    %59 = vmatpush.msra.mxu0 %v36
    %60 = vmatpush.msra.mxu0 %v35
    %61 = vmatpush.msra.mxu0 %v34
    %62 = vmatpush.msra.mxu0 %v33
    %63 = vmatpush.msra.mxu0 %v32
    %64 = vmatpush.msra.mxu0 %v31
    %65 = vmatmul.f32.gmra.mxu0 %v30
    %v66 = vpop.f32.mrf.mxu0
    %v67 = vadd.f32 %v48, %v66
    %68 = vdwg.mxu0
    %v69 = vtanh.pop %v67
    %v70 = vld [vmem:[%s2 + $0x1] sm:$0x1]
    %v71 = vperm.slane %v70, 0
    %v72 = vmul.f32 %v69, %v71
    %v73 = vld [vmem:[%s2 + $0x2] sm:$0x1]
    %v74 = vperm.slane %v73, 0
    %v75 = vadd.f32 %v72, %v74
    %s76 = scalar_lea.vmem [#allocation2], 128
    %v77 = vld [vmem:[%s76] sm:$0xff]
    %v78 = vld [vmem:[%s76 + $0x8] sm:$0xff]
    %v79 = vld [vmem:[%s76 + $0x10] sm:$0xff]
    %v80 = vld [vmem:[%s76 + $0x18] sm:$0xff]
    %v81 = vld [vmem:[%s76 + $0x20] sm:$0xff]
    %v82 = vld [vmem:[%s76 + $0x28] sm:$0xff]
    %v83 = vld [vmem:[%s76 + $0x30] sm:$0xff]
    %v84 = vld [vmem:[%s76 + $0x38] sm:$0xff]
    %v85 = vld [vmem:[%s76 + $0x40] sm:$0xff]
    %v86 = vld [vmem:[%s76 + $0x48] sm:$0xff]
    %v87 = vld [vmem:[%s76 + $0x50] sm:$0xff]
    %v88 = vld [vmem:[%s76 + $0x58] sm:$0xff]
    %v89 = vld [vmem:[%s76 + $0x60] sm:$0xff]
    %v90 = vld [vmem:[%s76 + $0x68] sm:$0xff]
    %v91 = vld [vmem:[%s76 + $0x70] sm:$0xff]
    %v92 = vld [vmem:[%s76 + $0x78] sm:$0xff]
    %v93 = vld [vmem:[%s2 + $0x3] sm:$0x1]
    %v94 = vperm.slane %v93, 0
    %95 = vmatpush.msra.mxu0 %v92
    %96 = vmatpush.msra.mxu0 %v91
    %97 = vmatpush.msra.mxu0 %v90
    %98 = vmatpush.msra.mxu0 %v89
    %99 = vmatpush.msra.mxu0 %v88
    %100 = vmatpush.msra.mxu0 %v87
    %101 = vmatpush.msra.mxu0 %v86
    %102 = vmatpush.msra.mxu0 %v85
    %103 = vmatpush.msra.mxu0 %v84
    %104 = vmatpush.msra.mxu0 %v83
    %105 = vmatpush.msra.mxu0 %v82
    %106 = vmatpush.msra.mxu0 %v81
    %107 = vmatpush.msra.mxu0 %v80
    %108 = vmatpush.msra.mxu0 %v79
    %109 = vmatpush.msra.mxu0 %v78
    %110 = vmatpush.msra.mxu0 %v77
    %111 = vmatmul.f32.gmra.mxu0 %v75
    %v112 = vpop.f32.mrf.mxu0
    %v113 = vadd.f32 %v94, %v112
    %114 = vdwg.mxu0
    %v115 = vtanh.pop %v113
    %v116 = vld [vmem:[%s2 + $0x4] sm:$0x1]
    %v117 = vperm.slane %v116, 0
    %v118 = vmul.f32 %v115, %v117
    %v119 = vld [vmem:[%s2 + $0x5] sm:$0x1]
    %v120 = vperm.slane %v119, 0
    %v121 = vadd.f32 %v118, %v120
    %s122 = scalar_lea.vmem [#allocation2], 256
    %v123 = vld [vmem:[%s122] sm:$0xff]
    %v124 = vld [vmem:[%s122 + $0x8] sm:$0xff]
    %v125 = vld [vmem:[%s122 + $0x10] sm:$0xff]
    %v126 = vld [vmem:[%s122 + $0x18] sm:$0xff]
    %v127 = vld [vmem:[%s122 + $0x20] sm:$0xff]
    %v128 = vld [vmem:[%s122 + $0x28] sm:$0xff]
    %v129 = vld [vmem:[%s122 + $0x30] sm:$0xff]
    %v130 = vld [vmem:[%s122 + $0x38] sm:$0xff]
    %v131 = vld [vmem:[%s122 + $0x40] sm:$0xff]
    %v132 = vld [vmem:[%s122 + $0x48] sm:$0xff]
    %v133 = vld [vmem:[%s122 + $0x50] sm:$0xff]
    %v134 = vld [vmem:[%s122 + $0x58] sm:$0xff]
    %v135 = vld [vmem:[%s122 + $0x60] sm:$0xff]
    %v136 = vld [vmem:[%s122 + $0x68] sm:$0xff]
    %v137 = vld [vmem:[%s122 + $0x70] sm:$0xff]
    %v138 = vld [vmem:[%s122 + $0x78] sm:$0xff]
    %v139 = vld [vmem:[%s2 + $0x6] sm:$0x1]
    %v140 = vperm.slane %v139, 0
    %141 = vmatpush.msra.mxu0 %v138
    %142 = vmatpush.msra.mxu0 %v137
    %143 = vmatpush.msra.mxu0 %v136
    %144 = vmatpush.msra.mxu0 %v135
    %145 = vmatpush.msra.mxu0 %v134
    %146 = vmatpush.msra.mxu0 %v133
    %147 = vmatpush.msra.mxu0 %v132
    %148 = vmatpush.msra.mxu0 %v131
    %149 = vmatpush.msra.mxu0 %v130
    %150 = vmatpush.msra.mxu0 %v129
    %151 = vmatpush.msra.mxu0 %v128
    %152 = vmatpush.msra.mxu0 %v127
    %153 = vmatpush.msra.mxu0 %v126
    %154 = vmatpush.msra.mxu0 %v125
    %155 = vmatpush.msra.mxu0 %v124
    %156 = vmatpush.msra.mxu0 %v123
    %157 = vmatmul.f32.gmra.mxu0 %v121
    %v158 = vpop.f32.mrf.mxu0
    %v159 = vadd.f32 %v140, %v158
    %160 = vdwg.mxu0
    %v161 = vtanh.pop %v159
    %v162 = vld [vmem:[%s2 + $0x7] sm:$0x1]
    %v163 = vperm.slane %v162, 0
    %v164 = vmul.f32 %v161, %v163
    %v165 = vld [vmem:[%s2 + $0x8] sm:$0x1]
    %v166 = vperm.slane %v165, 0
    %v167 = vadd.f32 %v164, %v166
    %s168 = scalar_lea.vmem [#allocation2], 384
    %v169 = vld [vmem:[%s168] sm:$0xff]
    %v170 = vld [vmem:[%s168 + $0x8] sm:$0xff]
    %v171 = vld [vmem:[%s168 + $0x10] sm:$0xff]
    %v172 = vld [vmem:[%s168 + $0x18] sm:$0xff]
    %v173 = vld [vmem:[%s168 + $0x20] sm:$0xff]
    %v174 = vld [vmem:[%s168 + $0x28] sm:$0xff]
    %v175 = vld [vmem:[%s168 + $0x30] sm:$0xff]
    %v176 = vld [vmem:[%s168 + $0x38] sm:$0xff]
    %v177 = vld [vmem:[%s168 + $0x40] sm:$0xff]
    %v178 = vld [vmem:[%s168 + $0x48] sm:$0xff]
    %v179 = vld [vmem:[%s168 + $0x50] sm:$0xff]
    %v180 = vld [vmem:[%s168 + $0x58] sm:$0xff]
    %v181 = vld [vmem:[%s168 + $0x60] sm:$0xff]
    %v182 = vld [vmem:[%s168 + $0x68] sm:$0xff]
    %v183 = vld [vmem:[%s168 + $0x70] sm:$0xff]
    %v184 = vld [vmem:[%s168 + $0x78] sm:$0xff]
    %v185 = vld [vmem:[%s2 + $0x9] sm:$0x1]
    %v186 = vperm.slane %v185, 0
    %187 = vmatpush.msra.mxu0 %v184
    %188 = vmatpush.msra.mxu0 %v183
    %189 = vmatpush.msra.mxu0 %v182
    %190 = vmatpush.msra.mxu0 %v181
    %191 = vmatpush.msra.mxu0 %v180
    %192 = vmatpush.msra.mxu0 %v179
    %193 = vmatpush.msra.mxu0 %v178
    %194 = vmatpush.msra.mxu0 %v177
    %195 = vmatpush.msra.mxu0 %v176
    %196 = vmatpush.msra.mxu0 %v175
    %197 = vmatpush.msra.mxu0 %v174
    %198 = vmatpush.msra.mxu0 %v173
    %199 = vmatpush.msra.mxu0 %v172
    %200 = vmatpush.msra.mxu0 %v171
    %201 = vmatpush.msra.mxu0 %v170
    %202 = vmatpush.msra.mxu0 %v169
    %203 = vmatmul.f32.gmra.mxu0 %v167
    %v204 = vpop.f32.mrf.mxu0
    %v205 = vadd.f32 %v186, %v204
    %206 = vdwg.mxu0
    %v207 = vmax.f32 %v205, 0.0
    %s208 = scalar_lea.vmem [#allocation2], 512
    %v209 = vld [vmem:[%s208] sm:$0xff]
    %v210 = vld [vmem:[%s208 + $0x8] sm:$0xff]
    %v211 = vld [vmem:[%s208 + $0x10] sm:$0xff]
    %v212 = vld [vmem:[%s208 + $0x18] sm:$0xff]
    %v213 = vld [vmem:[%s208 + $0x20] sm:$0xff]
    %v214 = vld [vmem:[%s208 + $0x28] sm:$0xff]
    %v215 = vld [vmem:[%s208 + $0x30] sm:$0xff]
    %v216 = vld [vmem:[%s208 + $0x38] sm:$0xff]
    %v217 = vld [vmem:[%s208 + $0x40] sm:$0xff]
    %v218 = vld [vmem:[%s208 + $0x48] sm:$0xff]
    %v219 = vld [vmem:[%s208 + $0x50] sm:$0xff]
    %v220 = vld [vmem:[%s208 + $0x58] sm:$0xff]
    %v221 = vld [vmem:[%s208 + $0x60] sm:$0xff]
    %v222 = vld [vmem:[%s208 + $0x68] sm:$0xff]
    %v223 = vld [vmem:[%s208 + $0x70] sm:$0xff]
    %v224 = vld [vmem:[%s208 + $0x78] sm:$0xff]
    %v225 = vld [vmem:[%s2 + $0xa] sm:$0x1]
    %v226 = vperm.slane %v225, 0
    %227 = vmatpush.msra.mxu0 %v224
    %228 = vmatpush.msra.mxu0 %v223
    %229 = vmatpush.msra.mxu0 %v222
    %230 = vmatpush.msra.mxu0 %v221
    %231 = vmatpush.msra.mxu0 %v220
    %232 = vmatpush.msra.mxu0 %v219
    %233 = vmatpush.msra.mxu0 %v218
    %234 = vmatpush.msra.mxu0 %v217
    %235 = vmatpush.msra.mxu0 %v216
    %236 = vmatpush.msra.mxu0 %v215
    %237 = vmatpush.msra.mxu0 %v214
    %238 = vmatpush.msra.mxu0 %v213
    %239 = vmatpush.msra.mxu0 %v212
    %240 = vmatpush.msra.mxu0 %v211
    %241 = vmatpush.msra.mxu0 %v210
    %242 = vmatpush.msra.mxu0 %v209
    %243 = vmatmul.f32.gmra.mxu0 %v207
    %v244 = vpop.f32.mrf.mxu0
    %v245 = vadd.f32 %v226, %v244
    %246 = vdwg.mxu0
    %v247 = vsub.f32 0.0, %v245
    %v248 = vmul.f32 %v247, 1.442695
    %v249 = vpow.pop %v248
    %v250 = vadd.f32 %v249, 1.0
    %v251 = vrcp.pop %v250
    %v252 = vmul.f32 %v250, %v251
    %v253 = vsub.f32 1.0, %v252
    %v254 = vmul.f32 %v251, %v253
    %v255 = vadd.f32 %v251, %v254
    %vm256 = vweird.f32 %v250
    %vm257 = vweird.f32 %v251
    %vm258 = vmor %vm256, %vm257
    %v259 = vsel %vm258, %v251, %v255
    %v260 = vand.u32 2147483647, %v250
    %vm261 = vcmp.eq.f32.partialorder %v260, 8.507059e+37
    %v262 = vand.u32 %v250, 2147483648
    %v263 = vor.u32 1.1754944e-38, %v262
    %v264 = vsel %vm261, %v263, %v259
    %v265 = vmul.f32 1.0, %v264
    %v266 = vmul.f32 %v265, %v167
    %s267 = scalar_lea.vmem [#allocation2], 640
    %v268 = vld [vmem:[%s267] sm:$0xff]
    %v269 = vld [vmem:[%s267 + $0x8] sm:$0xff]
    %v270 = vld [vmem:[%s267 + $0x10] sm:$0xff]
    %v271 = vld [vmem:[%s267 + $0x18] sm:$0xff]
    %v272 = vld [vmem:[%s267 + $0x20] sm:$0xff]
    %v273 = vld [vmem:[%s267 + $0x28] sm:$0xff]
    %v274 = vld [vmem:[%s267 + $0x30] sm:$0xff]
    %v275 = vld [vmem:[%s267 + $0x38] sm:$0xff]
    %v276 = vld [vmem:[%s267 + $0x40] sm:$0xff]
    %v277 = vld [vmem:[%s267 + $0x48] sm:$0xff]
    %v278 = vld [vmem:[%s267 + $0x50] sm:$0xff]
    %v279 = vld [vmem:[%s267 + $0x58] sm:$0xff]
    %v280 = vld [vmem:[%s267 + $0x60] sm:$0xff]
    %v281 = vld [vmem:[%s267 + $0x68] sm:$0xff]
    %v282 = vld [vmem:[%s267 + $0x70] sm:$0xff]
    %v283 = vld [vmem:[%s267 + $0x78] sm:$0xff]
    %v284 = vld [vmem:[%s2 + $0xb] sm:$0x1]
    %v285 = vperm.slane %v284, 0
    %286 = vmatpush.msra.mxu0 %v283
    %287 = vmatpush.msra.mxu0 %v282
    %288 = vmatpush.msra.mxu0 %v281
    %289 = vmatpush.msra.mxu0 %v280
    %290 = vmatpush.msra.mxu0 %v279
    %291 = vmatpush.msra.mxu0 %v278
    %292 = vmatpush.msra.mxu0 %v277
    %293 = vmatpush.msra.mxu0 %v276
    %294 = vmatpush.msra.mxu0 %v275
    %295 = vmatpush.msra.mxu0 %v274
    %296 = vmatpush.msra.mxu0 %v273
    %297 = vmatpush.msra.mxu0 %v272
    %298 = vmatpush.msra.mxu0 %v271
    %299 = vmatpush.msra.mxu0 %v270
    %300 = vmatpush.msra.mxu0 %v269
    %301 = vmatpush.msra.mxu0 %v268
    %302 = vmatmul.f32.gmra.mxu0 %v266
    %v303 = vpop.f32.mrf.mxu0
    %v304 = vadd.f32 %v285, %v303
    %305 = vdwg.mxu0
    %v306 = vtanh.pop %v304
    %s307 = scalar_lea.vmem [#allocation2], 768
    %v308 = vld [vmem:[%s307] sm:$0xff]
    %v309 = vld [vmem:[%s307 + $0x8] sm:$0xff]
    %v310 = vld [vmem:[%s307 + $0x10] sm:$0xff]
    %v311 = vld [vmem:[%s307 + $0x18] sm:$0xff]
    %v312 = vld [vmem:[%s307 + $0x20] sm:$0xff]
    %v313 = vld [vmem:[%s307 + $0x28] sm:$0xff]
    %v314 = vld [vmem:[%s307 + $0x30] sm:$0xff]
    %v315 = vld [vmem:[%s307 + $0x38] sm:$0xff]
    %v316 = vld [vmem:[%s307 + $0x40] sm:$0xff]
    %v317 = vld [vmem:[%s307 + $0x48] sm:$0xff]
    %v318 = vld [vmem:[%s307 + $0x50] sm:$0xff]
    %v319 = vld [vmem:[%s307 + $0x58] sm:$0xff]
    %v320 = vld [vmem:[%s307 + $0x60] sm:$0xff]
    %v321 = vld [vmem:[%s307 + $0x68] sm:$0xff]
    %v322 = vld [vmem:[%s307 + $0x70] sm:$0xff]
    %v323 = vld [vmem:[%s307 + $0x78] sm:$0xff]
    %v324 = vld [vmem:[%s2 + $0xc] sm:$0x1]
    %v325 = vperm.slane %v324, 0
    %326 = vmatpush.msra.mxu0 %v323
    %327 = vmatpush.msra.mxu0 %v322
    %328 = vmatpush.msra.mxu0 %v321
    %329 = vmatpush.msra.mxu0 %v320
    %330 = vmatpush.msra.mxu0 %v319
    %331 = vmatpush.msra.mxu0 %v318
    %332 = vmatpush.msra.mxu0 %v317
    %333 = vmatpush.msra.mxu0 %v316
    %334 = vmatpush.msra.mxu0 %v315
    %335 = vmatpush.msra.mxu0 %v314
    %336 = vmatpush.msra.mxu0 %v313
    %337 = vmatpush.msra.mxu0 %v312
    %338 = vmatpush.msra.mxu0 %v311
    %339 = vmatpush.msra.mxu0 %v310
    %340 = vmatpush.msra.mxu0 %v309
    %341 = vmatpush.msra.mxu0 %v308
    %342 = vmatmul.f32.gmra.mxu0 %v306
    %v343 = vpop.f32.mrf.mxu0
    %v344 = vadd.f32 %v325, %v343
    %345 = vdwg.mxu0
    %v346 = vmax.f32 %v344, 0.0
    %s347 = scalar_lea.vmem [#allocation2], 896
    %v348 = vld [vmem:[%s347] sm:$0xff]
    %v349 = vld [vmem:[%s347 + $0x8] sm:$0xff]
    %v350 = vld [vmem:[%s347 + $0x10] sm:$0xff]
    %v351 = vld [vmem:[%s347 + $0x18] sm:$0xff]
    %v352 = vld [vmem:[%s347 + $0x20] sm:$0xff]
    %v353 = vld [vmem:[%s347 + $0x28] sm:$0xff]
    %v354 = vld [vmem:[%s347 + $0x30] sm:$0xff]
    %v355 = vld [vmem:[%s347 + $0x38] sm:$0xff]
    %v356 = vld [vmem:[%s347 + $0x40] sm:$0xff]
    %v357 = vld [vmem:[%s347 + $0x48] sm:$0xff]
    %v358 = vld [vmem:[%s347 + $0x50] sm:$0xff]
    %v359 = vld [vmem:[%s347 + $0x58] sm:$0xff]
    %v360 = vld [vmem:[%s347 + $0x60] sm:$0xff]
    %v361 = vld [vmem:[%s347 + $0x68] sm:$0xff]
    %v362 = vld [vmem:[%s347 + $0x70] sm:$0xff]
    %v363 = vld [vmem:[%s347 + $0x78] sm:$0xff]
    %v364 = vld [vmem:[%s2 + $0xd] sm:$0x1]
    %v365 = vperm.slane %v364, 0
    %366 = vmatpush.msra.mxu0 %v363
    %367 = vmatpush.msra.mxu0 %v362
    %368 = vmatpush.msra.mxu0 %v361
    %369 = vmatpush.msra.mxu0 %v360
    %370 = vmatpush.msra.mxu0 %v359
    %371 = vmatpush.msra.mxu0 %v358
    %372 = vmatpush.msra.mxu0 %v357
    %373 = vmatpush.msra.mxu0 %v356
    %374 = vmatpush.msra.mxu0 %v355
    %375 = vmatpush.msra.mxu0 %v354
    %376 = vmatpush.msra.mxu0 %v353
    %377 = vmatpush.msra.mxu0 %v352
    %378 = vmatpush.msra.mxu0 %v351
    %379 = vmatpush.msra.mxu0 %v350
    %380 = vmatpush.msra.mxu0 %v349
    %381 = vmatpush.msra.mxu0 %v348
    %382 = vmatmul.f32.gmra.mxu0 %v346
    %v383 = vpop.f32.mrf.mxu0
    %v384 = vadd.f32 %v365, %v383
    %385 = vdwg.mxu0
    %v386 = vmax.f32 %v384, 0.0
    %s387 = scalar_lea.vmem [#allocation2], 1024
    %v388 = vld [vmem:[%s387] sm:$0xff]
    %v389 = vld [vmem:[%s387 + $0x8] sm:$0xff]
    %v390 = vld [vmem:[%s387 + $0x10] sm:$0xff]
    %v391 = vld [vmem:[%s387 + $0x18] sm:$0xff]
    %v392 = vld [vmem:[%s387 + $0x20] sm:$0xff]
    %v393 = vld [vmem:[%s387 + $0x28] sm:$0xff]
    %v394 = vld [vmem:[%s387 + $0x30] sm:$0xff]
    %v395 = vld [vmem:[%s387 + $0x38] sm:$0xff]
    %v396 = vld [vmem:[%s387 + $0x40] sm:$0xff]
    %v397 = vld [vmem:[%s387 + $0x48] sm:$0xff]
    %v398 = vld [vmem:[%s387 + $0x50] sm:$0xff]
    %v399 = vld [vmem:[%s387 + $0x58] sm:$0xff]
    %v400 = vld [vmem:[%s387 + $0x60] sm:$0xff]
    %v401 = vld [vmem:[%s387 + $0x68] sm:$0xff]
    %v402 = vld [vmem:[%s387 + $0x70] sm:$0xff]
    %v403 = vld [vmem:[%s387 + $0x78] sm:$0xff]
    %v404 = vld [vmem:[%s2 + $0xe] sm:$0x1]
    %v405 = vperm.slane %v404, 0
    %406 = vmatpush.msra.mxu0 %v403
    %407 = vmatpush.msra.mxu0 %v402
    %408 = vmatpush.msra.mxu0 %v401
    %409 = vmatpush.msra.mxu0 %v400
    %410 = vmatpush.msra.mxu0 %v399
    %411 = vmatpush.msra.mxu0 %v398
    %412 = vmatpush.msra.mxu0 %v397
    %413 = vmatpush.msra.mxu0 %v396
    %414 = vmatpush.msra.mxu0 %v395
    %415 = vmatpush.msra.mxu0 %v394
    %416 = vmatpush.msra.mxu0 %v393
    %417 = vmatpush.msra.mxu0 %v392
    %418 = vmatpush.msra.mxu0 %v391
    %419 = vmatpush.msra.mxu0 %v390
    %420 = vmatpush.msra.mxu0 %v389
    %421 = vmatpush.msra.mxu0 %v388
    %422 = vmatmul.f32.gmra.mxu0 %v386
    %v423 = vpop.f32.mrf.mxu0
    %v424 = vadd.f32 %v405, %v423
    %425 = vdwg.mxu0
    %s426 = scalar_lea.vmem [#allocation2], 1152
    %v427 = vld [vmem:[%s426] sm:$0xff]
    %v428 = vld [vmem:[%s426 + $0x8] sm:$0xff]
    %v429 = vld [vmem:[%s426 + $0x10] sm:$0xff]
    %v430 = vld [vmem:[%s426 + $0x18] sm:$0xff]
    %v431 = vld [vmem:[%s426 + $0x20] sm:$0xff]
    %v432 = vld [vmem:[%s426 + $0x28] sm:$0xff]
    %v433 = vld [vmem:[%s426 + $0x30] sm:$0xff]
    %v434 = vld [vmem:[%s426 + $0x38] sm:$0xff]
    %v435 = vld [vmem:[%s426 + $0x40] sm:$0xff]
    %v436 = vld [vmem:[%s426 + $0x48] sm:$0xff]
    %v437 = vld [vmem:[%s426 + $0x50] sm:$0xff]
    %v438 = vld [vmem:[%s426 + $0x58] sm:$0xff]
    %v439 = vld [vmem:[%s426 + $0x60] sm:$0xff]
    %v440 = vld [vmem:[%s426 + $0x68] sm:$0xff]
    %v441 = vld [vmem:[%s426 + $0x70] sm:$0xff]
    %v442 = vld [vmem:[%s426 + $0x78] sm:$0xff]
    %v443 = vld [vmem:[%s2 + $0xf] sm:$0x1]
    %v444 = vperm.slane %v443, 0
    %445 = vmatpush.msra.mxu0 %v442
    %446 = vmatpush.msra.mxu0 %v441
    %447 = vmatpush.msra.mxu0 %v440
    %448 = vmatpush.msra.mxu0 %v439
    %449 = vmatpush.msra.mxu0 %v438
    %450 = vmatpush.msra.mxu0 %v437
    %451 = vmatpush.msra.mxu0 %v436
    %452 = vmatpush.msra.mxu0 %v435
    %453 = vmatpush.msra.mxu0 %v434
    %454 = vmatpush.msra.mxu0 %v433
    %455 = vmatpush.msra.mxu0 %v432
    %456 = vmatpush.msra.mxu0 %v431
    %457 = vmatpush.msra.mxu0 %v430
    %458 = vmatpush.msra.mxu0 %v429
    %459 = vmatpush.msra.mxu0 %v428
    %460 = vmatpush.msra.mxu0 %v427
    %461 = vmatmul.f32.gmra.mxu0 %v424
    %v462 = vpop.f32.mrf.mxu0
    %v463 = vadd.f32 %v444, %v462
    %464 = vdwg.mxu0
    %v465 = vtanh.pop %v463
    %s466 = scalar_lea.vmem [#allocation2], 1280
    %v467 = vld [vmem:[%s466] sm:$0xff]
    %v468 = vld [vmem:[%s466 + $0x8] sm:$0xff]
    %v469 = vld [vmem:[%s466 + $0x10] sm:$0xff]
    %v470 = vld [vmem:[%s466 + $0x18] sm:$0xff]
    %v471 = vld [vmem:[%s466 + $0x20] sm:$0xff]
    %v472 = vld [vmem:[%s466 + $0x28] sm:$0xff]
    %v473 = vld [vmem:[%s466 + $0x30] sm:$0xff]
    %v474 = vld [vmem:[%s466 + $0x38] sm:$0xff]
    %v475 = vld [vmem:[%s466 + $0x40] sm:$0xff]
    %v476 = vld [vmem:[%s466 + $0x48] sm:$0xff]
    %v477 = vld [vmem:[%s466 + $0x50] sm:$0xff]
    %v478 = vld [vmem:[%s466 + $0x58] sm:$0xff]
    %v479 = vld [vmem:[%s466 + $0x60] sm:$0xff]
    %v480 = vld [vmem:[%s466 + $0x68] sm:$0xff]
    %v481 = vld [vmem:[%s466 + $0x70] sm:$0xff]
    %v482 = vld [vmem:[%s466 + $0x78] sm:$0xff]
    %v483 = vld [vmem:[%s2 + $0x10] sm:$0x1]
    %v484 = vperm.slane %v483, 0
    %485 = vmatpush.msra.mxu0 %v482
    %486 = vmatpush.msra.mxu0 %v481
    %487 = vmatpush.msra.mxu0 %v480
    %488 = vmatpush.msra.mxu0 %v479
    %489 = vmatpush.msra.mxu0 %v478
    %490 = vmatpush.msra.mxu0 %v477
    %491 = vmatpush.msra.mxu0 %v476
    %492 = vmatpush.msra.mxu0 %v475
    %493 = vmatpush.msra.mxu0 %v474
    %494 = vmatpush.msra.mxu0 %v473
    %495 = vmatpush.msra.mxu0 %v472
    %496 = vmatpush.msra.mxu0 %v471
    %497 = vmatpush.msra.mxu0 %v470
    %498 = vmatpush.msra.mxu0 %v469
    %499 = vmatpush.msra.mxu0 %v468
    %500 = vmatpush.msra.mxu0 %v467
    %501 = vmatmul.f32.gmra.mxu0 %v465
    %v502 = vpop.f32.mrf.mxu0
    %v503 = vadd.f32 %v484, %v502
    %504 = vdwg.mxu0
    %v505 = vadd.f32 %v424, %v465
    %v506 = vadd.f32 %v505, %v503
    %507 = vst [vmem:[%s3] sm:$0xff] %v506
    // Predicated region
    $region18: #{_fused_forward.1} parent=1 // pred_check
      _
    $region19: #{_fused_forward.1} parent=1 // pred_check_branch
      %509 = sbr.rel (0) target = $region21
    $region20: #{_fused_forward.1} parent=1 // pred_region
      _
    $region21: #{_fused_forward.1} parent=1 // pred_fallthru
      _
    // Predicated region
    $region22: #{_fused_forward.1} parent=1 // pred_check
      _
    $region23: #{_fused_forward.1} parent=1 // pred_check_branch
      %511 = sbr.rel (0) target = $region25
    $region24: #{_fused_forward.1} parent=1 // pred_region
      _
    $region25: #{_fused_forward.1} parent=1 // pred_fallthru
      _
    %512 = vsyncpa [#allocation3], 1

</llo_original>
